<compile_context>
chip_gen: v5e
topology: v5e:2x2
jax: 0.10.0
libtpu: 0.0.40
codegen_flags: <defaults>
</compile_context>

<pallas_src>
import math

import jax
import jax.numpy as jnp
from jax.experimental import pallas as pl
from jax.experimental.pallas import tpu as pltpu

# ----------------------------- model hyper-params ---------------------------
BATCH = 2            # batch_s
POMO = 8             # query length (last nodes per instance)
PROBLEM = 16         # number of nodes (key/value length)
EMBED = 32           # embedding_dim
HEAD_NUM = 4
QKV_DIM = 8
HQ = HEAD_NUM * QKV_DIM          # 32
HN = HEAD_NUM * PROBLEM          # 64  (all-head score width)
E1 = EMBED + 1                   # 33  (embedding + load column)
XW = 64                          # padded width for [eln, load] rows / Wq rows (>= E1)
R = BATCH * POMO                 # 16  (flattened (batch, pomo) rows)
SQRT_EMBEDDING_DIM = math.sqrt(EMBED)
LOGIT_CLIPPING = 10.0
INV_SQRT_QKV = 1.0 / math.sqrt(QKV_DIM)

# ---------------------- packed-buffer row layouts (static) ------------------
# pa (per-forward, 64 lanes):
#   rows 0:R      -> ninf_mask tiled per head, flattened over (b, p)   (R, HN)
#   rows R:2R     -> [encoded_last_node, load] padded to XW, flattened (R, XW)
PA_ROWS = 2 * R                                  # 32

# pk (static, 64 lanes): block-diagonal K per batch + segment-sum matrix
OFF_KBD = 0                                      # K_bd[b] at OFF_KBD + b*HQ   (HQ, HN)
OFF_SEG = BATCH * HQ                             # 64 ; SEG (HN, HN)
PK_ROWS = OFF_SEG + HN                           # 128

# pb (static, 32 lanes): everything else, stacked along sublanes
OFF_VBD = 0                                      # V_bd[b] at + b*HN           (HN, HQ)
OFF_NEW1 = OFF_VBD + BATCH * HN                  # 128 ; new_w[b]  at + b*HQ
OFF_NEW2 = OFF_NEW1 + BATCH * HQ                 # 192 ; new2_w[b] at + b*HQ
OFF_ENC = OFF_NEW2 + BATCH * HQ                  # 256 ; encoded_nodes[b] at + b*N
OFF_WQ = OFF_ENC + BATCH * PROBLEM               # 288 ; Wq_last padded (XW, HQ)
OFF_WC = OFF_WQ + XW                             # 352 ; multi_head_combine W (HQ, E)
OFF_NB1 = OFF_WC + HQ                            # 384 ; new_bias[b]   at + b  (1, HQ)
OFF_NB2 = OFF_NB1 + BATCH                        # 386 ; new_bias_2[b] at + b  (1, HQ)
OFF_BC = OFF_NB2 + BATCH                         # 388 ; multi_head_combine b  (1, E)
PB_ROWS = OFF_BC + 1                             # 389


# --------------------------------- kernel -----------------------------------
def _decoder_kernel(pa_ref, pk_ref, pb_ref, out_ref):
    # shared pieces (loaded once)
    mask_rep = pa_ref[0:R, :]                         # (R, HN)  -inf mask, tiled per head
    x_flat = pa_ref[R:2 * R, :]                       # (R, XW)  [eln, load, 0-pad]
    seg = pk_ref[OFF_SEG:OFF_SEG + HN, :]             # (HN, HN) 0/1 head-segment matrix
    wq = pb_ref[OFF_WQ:OFF_WQ + XW, :]                # (XW, HQ)
    wc = pb_ref[OFF_WC:OFF_WC + HQ, :]                # (HQ, E)
    bc = pb_ref[OFF_BC:OFF_BC + 1, :]                 # (1, E)

    # Wq_last projection for ALL (batch, pomo) rows in one 2-D matmul
    qkv = jnp.dot(x_flat, wq, preferred_element_type=jnp.float32)       # (R, HQ)

    for b in range(BATCH):                            # static unroll, B = 2
        q_b = qkv[b * POMO:(b + 1) * POMO, :]                           # (P, HQ)
        mask_b = mask_rep[b * POMO:(b + 1) * POMO, :]                   # (P, HN)
        k_bd = pk_ref[OFF_KBD + b * HQ:OFF_KBD + (b + 1) * HQ, :]       # (HQ, HN)
        v_bd = pb_ref[OFF_VBD + b * HN:OFF_VBD + (b + 1) * HN, :]       # (HN, HQ)
        new_w = pb_ref[OFF_NEW1 + b * HQ:OFF_NEW1 + (b + 1) * HQ, :]    # (HQ, HQ)
        new2_w = pb_ref[OFF_NEW2 + b * HQ:OFF_NEW2 + (b + 1) * HQ, :]   # (HQ, HQ)
        enc_b = pb_ref[OFF_ENC + b * PROBLEM:OFF_ENC + (b + 1) * PROBLEM, :]  # (N, E)
        new_b = pb_ref[OFF_NB1 + b:OFF_NB1 + b + 1, :]                  # (1, HQ)
        new2_b = pb_ref[OFF_NB2 + b:OFF_NB2 + b + 1, :]                 # (1, HQ)

        # ---- all-head attention in 3 matmuls (block-diagonal K / V) ----
        s = jnp.dot(q_b, k_bd, preferred_element_type=jnp.float32)      # (P, HN)
        s = s * INV_SQRT_QKV + mask_b
        # single row-max over all heads is a valid softmax shift (cancels per head)
        m = jnp.max(s, axis=-1, keepdims=True)                          # (P, 1)
        e = jnp.exp(s - m)                                              # (P, HN)
        # per-head denominators, replicated across each head's 16 lanes, via MXU
        denom = jnp.dot(e, seg, preferred_element_type=jnp.float32)     # (P, HN)
        w = e * pl.reciprocal(denom, approx=False)
        # PV: result is already the head-concatenated (P, HQ) layout
        out_c = jnp.dot(w, v_bd, preferred_element_type=jnp.float32)    # (P, HQ)

        # ---- per-instance added layers + residual ----
        h1 = jnp.dot(out_c, new_w, preferred_element_type=jnp.float32) + new_b
        h1 = jnp.maximum(h1, 0.0)
        h2 = jnp.dot(h1, new2_w, preferred_element_type=jnp.float32) + new2_b + out_c

        # ---- multi_head_combine ----
        mh = jnp.dot(h2, wc, preferred_element_type=jnp.float32) + bc   # (P, E)

        # ---- single-head score (contract over E; no pre-transposed key) ----
        score = jax.lax.dot_general(mh, enc_b, (((1,), (1,)), ((), ())),
                                    preferred_element_type=jnp.float32)  # (P, N)
        sc = LOGIT_CLIPPING * jnp.tanh(score * (1.0 / SQRT_EMBEDDING_DIM))
        sm = sc + mask_b[:, 0:PROBLEM]
        m2 = jnp.max(sm, axis=-1, keepdims=True)
        e2 = jnp.exp(sm - m2)
        d2 = jnp.sum(e2, axis=-1, keepdims=True)
        out_ref[b] = e2 * pl.reciprocal(d2, approx=False)


# ------------------------------- host-side glue ------------------------------
def build_static_packs(encoded_nodes, wk, wv, new_w, new_b, new2_w, new2_b,
                       wq, wc, bc):
    """set_kv + parameter packing: K/V projections laid out block-diagonally per head."""
    B, N, _ = encoded_nodes.shape
    H, d = HEAD_NUM, QKV_DIM
    kproj = jnp.einsum('bne,eh->bnh', encoded_nodes, wk).reshape(B, N, H, d)
    vproj = jnp.einsum('bne,eh->bnh', encoded_nodes, wv).reshape(B, N, H, d)
    eye = jnp.eye(H, dtype=jnp.float32)
    # K_bd[b, h*d+d', g*N+n] = kproj[b,n,h,d'] * (h==g)   -> (B, HQ, HN)
    k_bd = jnp.einsum('bnhd,hg->bhdgn', kproj, eye).reshape(B, HQ, HN)
    # V_bd[b, h*N+n, g*d+d'] = vproj[b,n,h,d'] * (h==g)   -> (B, HN, HQ)
    v_bd = jnp.einsum('bnhd,hg->bhngd', vproj, eye).reshape(B, HN, HQ)

    # segment-sum matrix: SEG[i, j] = 1 iff i, j belong to the same head block
    ridx = jnp.arange(HN) // PROBLEM
    seg = (ridx[:, None] == ridx[None, :]).astype(jnp.float32)          # (HN, HN)

    wq_pad = jnp.pad(wq, ((0, XW - E1), (0, 0)))                        # (XW, HQ)

    pk = jnp.concatenate([k_bd.reshape(B * HQ, HN), seg], axis=0)       # (PK_ROWS, HN)
    pb = jnp.concatenate([
        v_bd.reshape(B * HN, HQ),
        new_w.reshape(B * HQ, HQ),
        new2_w.reshape(B * HQ, HQ),
        encoded_nodes.reshape(B * N, EMBED),
        wq_pad,
        wc,
        new_b.reshape(B, HQ),
        new2_b.reshape(B, HQ),
        bc,
    ], axis=0)                                                          # (PB_ROWS, HQ)
    return pk, pb


def _build_dynamic_pack(encoded_last_node, load, ninf_mask):
    """Per-forward data packed into one lane-aligned (PA_ROWS, XW) buffer."""
    B, P, _ = encoded_last_node.shape
    x_cat = jnp.concatenate([encoded_last_node, load[:, :, None]], axis=2)   # (B,P,E1)
    x_pad = jnp.pad(x_cat, ((0, 0), (0, 0), (0, XW - E1))).reshape(B * P, XW)
    mask_rep = jnp.tile(ninf_mask, (1, 1, HEAD_NUM)).reshape(B * P, HN)
    return jnp.concatenate([mask_rep, x_pad], axis=0)                        # (PA_ROWS, XW)


@jax.jit
def forward_pallas(encoded_last_node, load, ninf_mask, pk, pb):
    pa = _build_dynamic_pack(encoded_last_node, load, ninf_mask)
    return pl.pallas_call(
        _decoder_kernel,
        out_shape=jax.ShapeDtypeStruct((BATCH, POMO, PROBLEM), jnp.float32),
        grid_spec=pltpu.PrefetchScalarGridSpec(
            num_scalar_prefetch=0,
            grid=(1,),                                   # whole batch in one step
            in_specs=[
                pl.BlockSpec((PA_ROWS, XW), lambda i: (0, 0)),     # per-forward pack
                pl.BlockSpec((PK_ROWS, HN), lambda i: (0, 0)),     # K_bd + SEG
                pl.BlockSpec((PB_ROWS, HQ), lambda i: (0, 0)),     # V_bd + params
            ],
            out_specs=pl.BlockSpec((BATCH, POMO, PROBLEM), lambda i: (0, 0, 0)),
        ),
        compiler_params=pltpu.CompilerParams(
            dimension_semantics=("arbitrary",)),
    )(pa, pk, pb)


# --------------------------- pure-JAX reference ------------------------------
def forward_reference(encoded_last_node, load, ninf_mask, encoded_nodes,
                      wk, wv, new_w, new_b, new2_w, new2_b, wq, wc, bc):
    B, P, _ = encoded_last_node.shape
    N = encoded_nodes.shape[1]
    input_cat = jnp.concatenate([encoded_last_node, load[:, :, None]], axis=2)
    qkv = jnp.einsum('bpe,eh->bph', input_cat, wq)
    q = qkv.reshape(B, P, HEAD_NUM, QKV_DIM).transpose(0, 2, 1, 3)
    kproj = jnp.einsum('bne,eh->bnh', encoded_nodes, wk)
    vproj = jnp.einsum('bne,eh->bnh', encoded_nodes, wv)
    k = kproj.reshape(B, N, HEAD_NUM, QKV_DIM).transpose(0, 2, 1, 3)
    v = vproj.reshape(B, N, HEAD_NUM, QKV_DIM).transpose(0, 2, 1, 3)
    s = jnp.einsum('bhpd,bhnd->bhpn', q, k) / math.sqrt(QKV_DIM)
    s = s + ninf_mask[:, None, :, :]
    w = jax.nn.softmax(s, axis=-1)
    o = jnp.einsum('bhpn,bhnd->bhpd', w, v)
    out_concat = o.transpose(0, 2, 1, 3).reshape(B, P, HQ)
    residual = out_concat
    h1 = jax.nn.relu(jnp.einsum('bph,bhk->bpk', out_concat, new_w) + new_b)
    h2 = jnp.einsum('bph,bhk->bpk', h1, new2_w) + new2_b + residual
    mh = jnp.einsum('bph,he->bpe', h2, wc) + bc[0]
    score = jnp.einsum('bpe,bne->bpn', mh, encoded_nodes)
    sc = LOGIT_CLIPPING * jnp.tanh(score / SQRT_EMBEDDING_DIM)
    return jax.nn.softmax(sc + ninf_mask, axis=-1)


# ----------------------------------- main ------------------------------------
if __name__ == "__main__":
    key = jax.random.PRNGKey(0)
    ks = jax.random.split(key, 12)

    # inputs
    encoded_nodes = jax.random.normal(ks[0], (BATCH, PROBLEM, EMBED), jnp.float32)
    encoded_last_node = jax.random.normal(ks[1], (BATCH, POMO, EMBED), jnp.float32)
    load = jax.random.uniform(ks[2], (BATCH, POMO), jnp.float32)
    # mask: some entries -inf, column 0 always unmasked so no row is fully masked
    rnd = jax.random.uniform(ks[3], (BATCH, POMO, PROBLEM))
    ninf_mask = jnp.where(rnd < 0.3, -jnp.inf, 0.0).astype(jnp.float32)
    ninf_mask = ninf_mask.at[:, :, 0].set(0.0)

    # parameters (deterministic synthetic init; xavier-ish scale).
    # NOTE: module __init__ zeros new_2 / new_bias_2; small random values are used
    # instead so that code path is actually exercised.
    def xavier(k, shape):
        fan_in, fan_out = shape[-2], shape[-1]
        lim = math.sqrt(6.0 / (fan_in + fan_out))
        return jax.random.uniform(k, shape, jnp.float32, -lim, lim)

    wq = xavier(ks[4], (E1, HQ))                        # Wq_last (no bias)
    wk = xavier(ks[5], (EMBED, HQ))                     # Wk      (no bias)
    wv = xavier(ks[6], (EMBED, HQ))                     # Wv      (no bias)
    wc = xavier(ks[7], (HQ, EMBED))                     # multi_head_combine W
    bc = jax.random.normal(ks[8], (1, EMBED), jnp.float32) * 0.01
    new_w = xavier(ks[9], (BATCH, HQ, HQ))
    new_b = xavier(ks[10], (BATCH, 1, HQ))
    new2_w = xavier(ks[11], (BATCH, HQ, HQ)) * 0.1
    new2_b = jnp.zeros((BATCH, 1, HQ), jnp.float32)

    # set_kv + static packing (one-time glue, mirrors the torch module's set_kv state)
    pk, pb = build_static_packs(encoded_nodes, wk, wv, new_w, new_b,
                                new2_w, new2_b, wq, wc, bc)
    pk = jax.block_until_ready(pk)
    pb = jax.block_until_ready(pb)

    probs = forward_pallas(encoded_last_node, load, ninf_mask, pk, pb)
    probs = jax.block_until_ready(probs)

    ref = forward_reference(encoded_last_node, load, ninf_mask, encoded_nodes,
                            wk, wv, new_w, new_b, new2_w, new2_b, wq, wc, bc)
    assert probs.shape == (BATCH, POMO, PROBLEM)
    assert bool(jnp.allclose(jnp.sum(probs, axis=-1), 1.0, atol=1e-5))
    assert bool(jnp.allclose(probs, ref, atol=2e-5, rtol=1e-4))

    print("KERNEL_OK")
</pallas_src>

<mosaic_0001>
module attributes {stable_mosaic.version = 11 : i64} {
  func.func @_decoder_kernel(%arg0: i32, %arg1: memref<32x64xf32, #tpu.memory_space<vmem>>, %arg2: memref<128x64xf32, #tpu.memory_space<vmem>>, %arg3: memref<389x32xf32, #tpu.memory_space<vmem>>, %arg4: memref<2x8x16xf32, #tpu.memory_space<vmem>>) attributes {dimension_semantics = [#tpu.dimension_semantics<arbitrary>], iteration_bounds = array<i64: 1>, scalar_prefetch = 0 : i64, scratch_operands = 0 : i64, tpu.core_type = #tpu.core_type<tc>, window_params = [{pipeline_mode = #tpu.pipeline_mode<synchronous>, transform_indices = @transform_0, window_bounds = array<i64: 32, 64>}, {pipeline_mode = #tpu.pipeline_mode<synchronous>, transform_indices = @transform_1, window_bounds = array<i64: 128, 64>}, {pipeline_mode = #tpu.pipeline_mode<synchronous>, transform_indices = @transform_2, window_bounds = array<i64: 389, 32>}, {pipeline_mode = #tpu.pipeline_mode<synchronous>, transform_indices = @transform_3, window_bounds = array<i64: 2, 8, 16>}]} {
    %c0 = arith.constant 0 : index
    %c0_0 = arith.constant 0 : index
    %0 = vector.load %arg1[%c0, %c0_0] : memref<32x64xf32, #tpu.memory_space<vmem>>, vector<16x64xf32>
    %c16 = arith.constant 16 : index
    %c0_1 = arith.constant 0 : index
    %1 = vector.load %arg1[%c16, %c0_1] : memref<32x64xf32, #tpu.memory_space<vmem>>, vector<16x64xf32>
    %c64 = arith.constant 64 : index
    %c0_2 = arith.constant 0 : index
    %2 = vector.load %arg2[%c64, %c0_2] : memref<128x64xf32, #tpu.memory_space<vmem>>, vector<64x64xf32>
    %c288 = arith.constant 288 : index
    %c0_3 = arith.constant 0 : index
    %3 = vector.load %arg3[%c288, %c0_3] : memref<389x32xf32, #tpu.memory_space<vmem>>, vector<64x32xf32>
    %c352 = arith.constant 352 : index
    %c0_4 = arith.constant 0 : index
    %4 = vector.load %arg3[%c352, %c0_4] : memref<389x32xf32, #tpu.memory_space<vmem>>, vector<32x32xf32>
    %c388 = arith.constant 388 : index
    %c0_5 = arith.constant 0 : index
    %5 = vector.load %arg3[%c388, %c0_5] : memref<389x32xf32, #tpu.memory_space<vmem>>, vector<1x32xf32>
    %cst = arith.constant dense<0.000000e+00> : vector<16x32xf32>
    %6 = tpu.matmul %1, %3, %cst {dimension_numbers = #tpu.dot_dimension_numbers<[1], [0], [0], [1], [0, 0, 1, 1], [], []>} : vector<16x64xf32>, vector<64x32xf32>, vector<16x32xf32> -> vector<16x32xf32>
    %7 = vector.extract_strided_slice %6 {offsets = [0, 0], sizes = [8, 32], strides = [1, 1]} : vector<16x32xf32> to vector<8x32xf32>
    %8 = vector.extract_strided_slice %0 {offsets = [0, 0], sizes = [8, 64], strides = [1, 1]} : vector<16x64xf32> to vector<8x64xf32>
    %c0_6 = arith.constant 0 : index
    %c0_7 = arith.constant 0 : index
    %9 = vector.load %arg2[%c0_6, %c0_7] : memref<128x64xf32, #tpu.memory_space<vmem>>, vector<32x64xf32>
    %c0_8 = arith.constant 0 : index
    %c0_9 = arith.constant 0 : index
    %10 = vector.load %arg3[%c0_8, %c0_9] : memref<389x32xf32, #tpu.memory_space<vmem>>, vector<64x32xf32>
    %c128 = arith.constant 128 : index
    %c0_10 = arith.constant 0 : index
    %11 = vector.load %arg3[%c128, %c0_10] : memref<389x32xf32, #tpu.memory_space<vmem>>, vector<32x32xf32>
    %c192 = arith.constant 192 : index
    %c0_11 = arith.constant 0 : index
    %12 = vector.load %arg3[%c192, %c0_11] : memref<389x32xf32, #tpu.memory_space<vmem>>, vector<32x32xf32>
    %c256 = arith.constant 256 : index
    %c0_12 = arith.constant 0 : index
    %13 = vector.load %arg3[%c256, %c0_12] : memref<389x32xf32, #tpu.memory_space<vmem>>, vector<16x32xf32>
    %c384 = arith.constant 384 : index
    %c0_13 = arith.constant 0 : index
    %14 = vector.load %arg3[%c384, %c0_13] : memref<389x32xf32, #tpu.memory_space<vmem>>, vector<1x32xf32>
    %c386 = arith.constant 386 : index
    %c0_14 = arith.constant 0 : index
    %15 = vector.load %arg3[%c386, %c0_14] : memref<389x32xf32, #tpu.memory_space<vmem>>, vector<1x32xf32>
    %cst_15 = arith.constant dense<0.000000e+00> : vector<8x64xf32>
    %16 = tpu.matmul %7, %9, %cst_15 {dimension_numbers = #tpu.dot_dimension_numbers<[1], [0], [0], [1], [0, 0, 1, 1], [], []>} : vector<8x32xf32>, vector<32x64xf32>, vector<8x64xf32> -> vector<8x64xf32>
    %cst_16 = arith.constant 0.353553385 : f32
    %17 = vector.broadcast %cst_16 : f32 to vector<8x64xf32>
    %18 = arith.mulf %16, %17 : vector<8x64xf32>
    %19 = arith.addf %18, %8 : vector<8x64xf32>
    %cst_17 = arith.constant dense<0xFF800000> : vector<8xf32>
    %20 = vector.multi_reduction <maximumf>, %19, %cst_17 [1] : vector<8x64xf32> to vector<8xf32>
    %21 = vector.shape_cast %20 : vector<8xf32> to vector<8x1xf32>
    %22 = vector.broadcast %21 : vector<8x1xf32> to vector<8x64xf32>
    %23 = arith.subf %19, %22 : vector<8x64xf32>
    %24 = math.exp %23 : vector<8x64xf32>
    %cst_18 = arith.constant dense<0.000000e+00> : vector<8x64xf32>
    %25 = tpu.matmul %24, %2, %cst_18 {dimension_numbers = #tpu.dot_dimension_numbers<[1], [0], [0], [1], [0, 0, 1, 1], [], []>} : vector<8x64xf32>, vector<64x64xf32>, vector<8x64xf32> -> vector<8x64xf32>
    %26 = tpu.reciprocal %25 : vector<8x64xf32> -> vector<8x64xf32>
    %27 = arith.mulf %24, %26 : vector<8x64xf32>
    %cst_19 = arith.constant dense<0.000000e+00> : vector<8x32xf32>
    %28 = tpu.matmul %27, %10, %cst_19 {dimension_numbers = #tpu.dot_dimension_numbers<[1], [0], [0], [1], [0, 0, 1, 1], [], []>} : vector<8x64xf32>, vector<64x32xf32>, vector<8x32xf32> -> vector<8x32xf32>
    %cst_20 = arith.constant dense<0.000000e+00> : vector<8x32xf32>
    %29 = tpu.matmul %28, %11, %cst_20 {dimension_numbers = #tpu.dot_dimension_numbers<[1], [0], [0], [1], [0, 0, 1, 1], [], []>} : vector<8x32xf32>, vector<32x32xf32>, vector<8x32xf32> -> vector<8x32xf32>
    %30 = vector.broadcast %14 : vector<1x32xf32> to vector<8x32xf32>
    %31 = arith.addf %29, %30 : vector<8x32xf32>
    %cst_21 = arith.constant 0.000000e+00 : f32
    %32 = vector.broadcast %cst_21 : f32 to vector<8x32xf32>
    %33 = arith.maximumf %31, %32 : vector<8x32xf32>
    %cst_22 = arith.constant dense<0.000000e+00> : vector<8x32xf32>
    %34 = tpu.matmul %33, %12, %cst_22 {dimension_numbers = #tpu.dot_dimension_numbers<[1], [0], [0], [1], [0, 0, 1, 1], [], []>} : vector<8x32xf32>, vector<32x32xf32>, vector<8x32xf32> -> vector<8x32xf32>
    %35 = vector.broadcast %15 : vector<1x32xf32> to vector<8x32xf32>
    %36 = arith.addf %34, %35 : vector<8x32xf32>
    %37 = arith.addf %36, %28 : vector<8x32xf32>
    %cst_23 = arith.constant dense<0.000000e+00> : vector<8x32xf32>
    %38 = tpu.matmul %37, %4, %cst_23 {dimension_numbers = #tpu.dot_dimension_numbers<[1], [0], [0], [1], [0, 0, 1, 1], [], []>} : vector<8x32xf32>, vector<32x32xf32>, vector<8x32xf32> -> vector<8x32xf32>
    %39 = vector.broadcast %5 : vector<1x32xf32> to vector<8x32xf32>
    %40 = arith.addf %38, %39 : vector<8x32xf32>
    %cst_24 = arith.constant dense<0.000000e+00> : vector<8x16xf32>
    %41 = tpu.matmul %40, %13, %cst_24 {dimension_numbers = #tpu.dot_dimension_numbers<[1], [1], [0], [0], [0, 0, 1, 0], [], []>} : vector<8x32xf32>, vector<16x32xf32>, vector<8x16xf32> -> vector<8x16xf32>
    %cst_25 = arith.constant 0.176776692 : f32
    %42 = vector.broadcast %cst_25 : f32 to vector<8x16xf32>
    %43 = arith.mulf %41, %42 : vector<8x16xf32>
    %44 = math.tanh %43 : vector<8x16xf32>
    %cst_26 = arith.constant 1.000000e+01 : f32
    %45 = vector.broadcast %cst_26 : f32 to vector<8x16xf32>
    %46 = arith.mulf %45, %44 : vector<8x16xf32>
    %47 = vector.extract_strided_slice %8 {offsets = [0, 0], sizes = [8, 16], strides = [1, 1]} : vector<8x64xf32> to vector<8x16xf32>
    %48 = arith.addf %46, %47 : vector<8x16xf32>
    %cst_27 = arith.constant dense<0xFF800000> : vector<8xf32>
    %49 = vector.multi_reduction <maximumf>, %48, %cst_27 [1] : vector<8x16xf32> to vector<8xf32>
    %50 = vector.shape_cast %49 : vector<8xf32> to vector<8x1xf32>
    %51 = vector.broadcast %50 : vector<8x1xf32> to vector<8x16xf32>
    %52 = arith.subf %48, %51 : vector<8x16xf32>
    %53 = math.exp %52 : vector<8x16xf32>
    %cst_28 = arith.constant dense<0.000000e+00> : vector<8xf32>
    %54 = vector.multi_reduction <add>, %53, %cst_28 [1] : vector<8x16xf32> to vector<8xf32>
    %55 = vector.shape_cast %54 : vector<8xf32> to vector<8x1xf32>
    %56 = tpu.reciprocal %55 : vector<8x1xf32> -> vector<8x1xf32>
    %57 = vector.broadcast %56 : vector<8x1xf32> to vector<8x16xf32>
    %58 = arith.mulf %53, %57 : vector<8x16xf32>
    %c0_29 = arith.constant 0 : index
    %c0_30 = arith.constant 0 : index
    %c0_31 = arith.constant 0 : index
    %59 = vector.load %arg4[%c0_29, %c0_30, %c0_31] : memref<2x8x16xf32, #tpu.memory_space<vmem>>, vector<1x8x16xf32>
    %60 = vector.shape_cast %59 : vector<1x8x16xf32> to vector<8x16xf32>
    %61 = vector.shape_cast %58 : vector<8x16xf32> to vector<1x8x16xf32>
    tpu.vector_store %arg4[%c0_29, %c0_30, %c0_31], %61 {strides = array<i32>} : memref<2x8x16xf32, #tpu.memory_space<vmem>>, vector<1x8x16xf32>,
    %62 = vector.extract_strided_slice %6 {offsets = [8, 0], sizes = [8, 32], strides = [1, 1]} : vector<16x32xf32> to vector<8x32xf32>
    %63 = vector.extract_strided_slice %0 {offsets = [8, 0], sizes = [8, 64], strides = [1, 1]} : vector<16x64xf32> to vector<8x64xf32>
    %c32 = arith.constant 32 : index
    %c0_32 = arith.constant 0 : index
    %64 = vector.load %arg2[%c32, %c0_32] : memref<128x64xf32, #tpu.memory_space<vmem>>, vector<32x64xf32>
    %c64_33 = arith.constant 64 : index
    %c0_34 = arith.constant 0 : index
    %65 = vector.load %arg3[%c64_33, %c0_34] : memref<389x32xf32, #tpu.memory_space<vmem>>, vector<64x32xf32>
    %c160 = arith.constant 160 : index
    %c0_35 = arith.constant 0 : index
    %66 = vector.load %arg3[%c160, %c0_35] : memref<389x32xf32, #tpu.memory_space<vmem>>, vector<32x32xf32>
    %c224 = arith.constant 224 : index
    %c0_36 = arith.constant 0 : index
    %67 = vector.load %arg3[%c224, %c0_36] : memref<389x32xf32, #tpu.memory_space<vmem>>, vector<32x32xf32>
    %c272 = arith.constant 272 : index
    %c0_37 = arith.constant 0 : index
    %68 = vector.load %arg3[%c272, %c0_37] : memref<389x32xf32, #tpu.memory_space<vmem>>, vector<16x32xf32>
    %c385 = arith.constant 385 : index
    %c0_38 = arith.constant 0 : index
    %69 = vector.load %arg3[%c385, %c0_38] : memref<389x32xf32, #tpu.memory_space<vmem>>, vector<1x32xf32>
    %c387 = arith.constant 387 : index
    %c0_39 = arith.constant 0 : index
    %70 = vector.load %arg3[%c387, %c0_39] : memref<389x32xf32, #tpu.memory_space<vmem>>, vector<1x32xf32>
    %cst_40 = arith.constant dense<0.000000e+00> : vector<8x64xf32>
    %71 = tpu.matmul %62, %64, %cst_40 {dimension_numbers = #tpu.dot_dimension_numbers<[1], [0], [0], [1], [0, 0, 1, 1], [], []>} : vector<8x32xf32>, vector<32x64xf32>, vector<8x64xf32> -> vector<8x64xf32>
    %cst_41 = arith.constant 0.353553385 : f32
    %72 = vector.broadcast %cst_41 : f32 to vector<8x64xf32>
    %73 = arith.mulf %71, %72 : vector<8x64xf32>
    %74 = arith.addf %73, %63 : vector<8x64xf32>
    %cst_42 = arith.constant dense<0xFF800000> : vector<8xf32>
    %75 = vector.multi_reduction <maximumf>, %74, %cst_42 [1] : vector<8x64xf32> to vector<8xf32>
    %76 = vector.shape_cast %75 : vector<8xf32> to vector<8x1xf32>
    %77 = vector.broadcast %76 : vector<8x1xf32> to vector<8x64xf32>
    %78 = arith.subf %74, %77 : vector<8x64xf32>
    %79 = math.exp %78 : vector<8x64xf32>
    %cst_43 = arith.constant dense<0.000000e+00> : vector<8x64xf32>
    %80 = tpu.matmul %79, %2, %cst_43 {dimension_numbers = #tpu.dot_dimension_numbers<[1], [0], [0], [1], [0, 0, 1, 1], [], []>} : vector<8x64xf32>, vector<64x64xf32>, vector<8x64xf32> -> vector<8x64xf32>
    %81 = tpu.reciprocal %80 : vector<8x64xf32> -> vector<8x64xf32>
    %82 = arith.mulf %79, %81 : vector<8x64xf32>
    %cst_44 = arith.constant dense<0.000000e+00> : vector<8x32xf32>
    %83 = tpu.matmul %82, %65, %cst_44 {dimension_numbers = #tpu.dot_dimension_numbers<[1], [0], [0], [1], [0, 0, 1, 1], [], []>} : vector<8x64xf32>, vector<64x32xf32>, vector<8x32xf32> -> vector<8x32xf32>
    %cst_45 = arith.constant dense<0.000000e+00> : vector<8x32xf32>
    %84 = tpu.matmul %83, %66, %cst_45 {dimension_numbers = #tpu.dot_dimension_numbers<[1], [0], [0], [1], [0, 0, 1, 1], [], []>} : vector<8x32xf32>, vector<32x32xf32>, vector<8x32xf32> -> vector<8x32xf32>
    %85 = vector.broadcast %69 : vector<1x32xf32> to vector<8x32xf32>
    %86 = arith.addf %84, %85 : vector<8x32xf32>
    %cst_46 = arith.constant 0.000000e+00 : f32
    %87 = vector.broadcast %cst_46 : f32 to vector<8x32xf32>
    %88 = arith.maximumf %86, %87 : vector<8x32xf32>
    %cst_47 = arith.constant dense<0.000000e+00> : vector<8x32xf32>
    %89 = tpu.matmul %88, %67, %cst_47 {dimension_numbers = #tpu.dot_dimension_numbers<[1], [0], [0], [1], [0, 0, 1, 1], [], []>} : vector<8x32xf32>, vector<32x32xf32>, vector<8x32xf32> -> vector<8x32xf32>
    %90 = vector.broadcast %70 : vector<1x32xf32> to vector<8x32xf32>
    %91 = arith.addf %89, %90 : vector<8x32xf32>
    %92 = arith.addf %91, %83 : vector<8x32xf32>
    %cst_48 = arith.constant dense<0.000000e+00> : vector<8x32xf32>
    %93 = tpu.matmul %92, %4, %cst_48 {dimension_numbers = #tpu.dot_dimension_numbers<[1], [0], [0], [1], [0, 0, 1, 1], [], []>} : vector<8x32xf32>, vector<32x32xf32>, vector<8x32xf32> -> vector<8x32xf32>
    %94 = vector.broadcast %5 : vector<1x32xf32> to vector<8x32xf32>
    %95 = arith.addf %93, %94 : vector<8x32xf32>
    %cst_49 = arith.constant dense<0.000000e+00> : vector<8x16xf32>
    %96 = tpu.matmul %95, %68, %cst_49 {dimension_numbers = #tpu.dot_dimension_numbers<[1], [1], [0], [0], [0, 0, 1, 0], [], []>} : vector<8x32xf32>, vector<16x32xf32>, vector<8x16xf32> -> vector<8x16xf32>
    %cst_50 = arith.constant 0.176776692 : f32
    %97 = vector.broadcast %cst_50 : f32 to vector<8x16xf32>
    %98 = arith.mulf %96, %97 : vector<8x16xf32>
    %99 = math.tanh %98 : vector<8x16xf32>
    %cst_51 = arith.constant 1.000000e+01 : f32
    %100 = vector.broadcast %cst_51 : f32 to vector<8x16xf32>
    %101 = arith.mulf %100, %99 : vector<8x16xf32>
    %102 = vector.extract_strided_slice %63 {offsets = [0, 0], sizes = [8, 16], strides = [1, 1]} : vector<8x64xf32> to vector<8x16xf32>
    %103 = arith.addf %101, %102 : vector<8x16xf32>
    %cst_52 = arith.constant dense<0xFF800000> : vector<8xf32>
    %104 = vector.multi_reduction <maximumf>, %103, %cst_52 [1] : vector<8x16xf32> to vector<8xf32>
    %105 = vector.shape_cast %104 : vector<8xf32> to vector<8x1xf32>
    %106 = vector.broadcast %105 : vector<8x1xf32> to vector<8x16xf32>
    %107 = arith.subf %103, %106 : vector<8x16xf32>
    %108 = math.exp %107 : vector<8x16xf32>
    %cst_53 = arith.constant dense<0.000000e+00> : vector<8xf32>
    %109 = vector.multi_reduction <add>, %108, %cst_53 [1] : vector<8x16xf32> to vector<8xf32>
    %110 = vector.shape_cast %109 : vector<8xf32> to vector<8x1xf32>
    %111 = tpu.reciprocal %110 : vector<8x1xf32> -> vector<8x1xf32>
    %112 = vector.broadcast %111 : vector<8x1xf32> to vector<8x16xf32>
    %113 = arith.mulf %108, %112 : vector<8x16xf32>
    %c1 = arith.constant 1 : index
    %c0_54 = arith.constant 0 : index
    %c0_55 = arith.constant 0 : index
    %114 = vector.load %arg4[%c1, %c0_54, %c0_55] : memref<2x8x16xf32, #tpu.memory_space<vmem>>, vector<1x8x16xf32>
    %115 = vector.shape_cast %114 : vector<1x8x16xf32> to vector<8x16xf32>
    %116 = vector.shape_cast %113 : vector<8x16xf32> to vector<1x8x16xf32>
    tpu.vector_store %arg4[%c1, %c0_54, %c0_55], %116 {strides = array<i32>} : memref<2x8x16xf32, #tpu.memory_space<vmem>>, vector<1x8x16xf32>,
    return
  }
  func.func @transform_0(%arg0: i32) -> (i32, i32) {
    %c0_i32 = arith.constant 0 : i32
    %c0_i32_0 = arith.constant 0 : i32
    %c0_i32_1 = arith.constant 0 : i32
    return %c0_i32, %c0_i32_0 : i32, i32
  }
  func.func @transform_1(%arg0: i32) -> (i32, i32) {
    %c0_i32 = arith.constant 0 : i32
    %c0_i32_0 = arith.constant 0 : i32
    %c0_i32_1 = arith.constant 0 : i32
    return %c0_i32, %c0_i32_0 : i32, i32
  }
  func.func @transform_2(%arg0: i32) -> (i32, i32) {
    %c0_i32 = arith.constant 0 : i32
    %c0_i32_0 = arith.constant 0 : i32
    %c0_i32_1 = arith.constant 0 : i32
    return %c0_i32, %c0_i32_0 : i32, i32
  }
  func.func @transform_3(%arg0: i32) -> (i32, i32, i32) {
    %c0_i32 = arith.constant 0 : i32
    %c0_i32_0 = arith.constant 0 : i32
    %c0_i32_1 = arith.constant 0 : i32
    %c0_i32_2 = arith.constant 0 : i32
    return %c0_i32, %c0_i32_0, %c0_i32_1 : i32, i32, i32
  }
}

</mosaic_0001>

<llo_original>
// kernel: tile.9
$region0: #{tile.9}
  %s0 = inlined_call_operand.vmem [shape: f32[2,1,8,4,16], index: 0, kind: input, shape index: {}]
  %s1 = inlined_call_operand.vmem [shape: f32[16,64], index: 1, kind: output, shape index: {}]
  $region1: #{tile.9} parent=0
    #allocation0 [shape = 'u8[65536]{0}', space=vmem, size = 0x10000, scoped, tag = 'scoped mem for input reshape']
    %s3 = ssub.s32 16, 1
    %s4 = scalar_lea.vmem %s0, 60
    %v5 = vld [vmem:[%s4] sm:%s3]
    %s6 = scalar_lea.vmem [#allocation0], 120
    %7 = vst [vmem:[%s6] sm:%s3] %v5
    %s8 = scalar_lea.vmem %s0, 56
    %v9 = vld [vmem:[%s8] sm:%s3]
    %s10 = scalar_lea.vmem [#allocation0], 112
    %11 = vst [vmem:[%s10] sm:%s3] %v9
    %s12 = scalar_lea.vmem %s0, 52
    %v13 = vld [vmem:[%s12] sm:%s3]
    %s14 = scalar_lea.vmem [#allocation0], 104
    %15 = vst [vmem:[%s14] sm:%s3] %v13
    %s16 = scalar_lea.vmem %s0, 48
    %v17 = vld [vmem:[%s16] sm:%s3]
    %s18 = scalar_lea.vmem [#allocation0], 96
    %19 = vst [vmem:[%s18] sm:%s3] %v17
    %s20 = scalar_lea.vmem %s0, 44
    %v21 = vld [vmem:[%s20] sm:%s3]
    %s22 = scalar_lea.vmem [#allocation0], 88
    %23 = vst [vmem:[%s22] sm:%s3] %v21
    %s24 = scalar_lea.vmem %s0, 40
    %v25 = vld [vmem:[%s24] sm:%s3]
    %s26 = scalar_lea.vmem [#allocation0], 80
    %27 = vst [vmem:[%s26] sm:%s3] %v25
    %s28 = scalar_lea.vmem %s0, 36
    %v29 = vld [vmem:[%s28] sm:%s3]
    %s30 = scalar_lea.vmem [#allocation0], 72
    %31 = vst [vmem:[%s30] sm:%s3] %v29
    %s32 = scalar_lea.vmem %s0, 32
    %v33 = vld [vmem:[%s32] sm:%s3]
    %s34 = scalar_lea.vmem [#allocation0], 64
    %35 = vst [vmem:[%s34] sm:%s3] %v33
    %s36 = scalar_lea.vmem %s0, 28
    %v37 = vld [vmem:[%s36] sm:%s3]
    %s38 = scalar_lea.vmem [#allocation0], 56
    %39 = vst [vmem:[%s38] sm:%s3] %v37
    %s40 = scalar_lea.vmem %s0, 24
    %v41 = vld [vmem:[%s40] sm:%s3]
    %s42 = scalar_lea.vmem [#allocation0], 48
    %43 = vst [vmem:[%s42] sm:%s3] %v41
    %s44 = scalar_lea.vmem %s0, 20
    %v45 = vld [vmem:[%s44] sm:%s3]
    %s46 = scalar_lea.vmem [#allocation0], 40
    %47 = vst [vmem:[%s46] sm:%s3] %v45
    %s48 = scalar_lea.vmem %s0, 16
    %v49 = vld [vmem:[%s48] sm:%s3]
    %s50 = scalar_lea.vmem [#allocation0], 32
    %51 = vst [vmem:[%s50] sm:%s3] %v49
    %s52 = scalar_lea.vmem %s0, 12
    %v53 = vld [vmem:[%s52] sm:%s3]
    %s54 = scalar_lea.vmem [#allocation0], 24
    %55 = vst [vmem:[%s54] sm:%s3] %v53
    %s56 = scalar_lea.vmem %s0, 8
    %v57 = vld [vmem:[%s56] sm:%s3]
    %s58 = scalar_lea.vmem [#allocation0], 16
    %59 = vst [vmem:[%s58] sm:%s3] %v57
    %s60 = scalar_lea.vmem %s0, 4
    %v61 = vld [vmem:[%s60] sm:%s3]
    %s62 = scalar_lea.vmem [#allocation0], 8
    %63 = vst [vmem:[%s62] sm:%s3] %v61
    %v64 = vld [vmem:[%s0] sm:%s3]
    %65 = vst [vmem:[#allocation0] sm:%s3] %v64
    %v66 = vld [vmem:[#allocation0] ss:$8 sm:$0xf]
    %v67 = vld [vmem:[#allocation0] ss:$8 sm:$0xf0]
    %vm68 = vcmask 1047556
    %v69 = vsel %vm68, %v67, %v66
    %vm70 = vcmask 130048
    %71 = vst.msk [vmem:[%s1] sm:$0xff] %vm70, %v69
    %s72 = scalar_lea.vmem [#allocation0], 64
    %v73 = vld [vmem:[%s72] ss:$8 sm:$0xf]
    %s74 = scalar_lea.vmem [#allocation0], 64
    %v75 = vld [vmem:[%s74] ss:$8 sm:$0xf0]
    %vm76 = vcmask 1047556
    %v77 = vsel %vm76, %v75, %v73
    %vm78 = vcmask 130048
    %s79 = scalar_lea.vmem %s1, 8
    %80 = vst.msk [vmem:[%s79] sm:$0xff] %vm78, %v77
    %s81 = scalar_lea.vmem [#allocation0], 3
    %v82 = vld [vmem:[%s81] ss:$8 sm:$0xf]
    %s83 = scalar_lea.vmem [#allocation0], 3
    %v84 = vld [vmem:[%s83] ss:$8 sm:$0xf0]
    %vm85 = vcmask 1047556
    %v86 = vsel %vm85, %v84, %v82
    %87 = vrot.lane.b32.xlu0 %v86, 48
    %v88 = vpop.permute.xlu0 %87
    %vm89 = vcmask 523648
    %90 = vst.msk [vmem:[%s1] sm:$0xff] %vm89, %v88
    %s91 = scalar_lea.vmem [#allocation0], 67
    %v92 = vld [vmem:[%s91] ss:$8 sm:$0xf]
    %s93 = scalar_lea.vmem [#allocation0], 67
    %v94 = vld [vmem:[%s93] ss:$8 sm:$0xf0]
    %vm95 = vcmask 1047556
    %v96 = vsel %vm95, %v94, %v92
    %97 = vrot.lane.b32.xlu0 %v96, 48
    %v98 = vpop.permute.xlu0 %97
    %vm99 = vcmask 523648
    %s100 = scalar_lea.vmem %s1, 8
    %101 = vst.msk [vmem:[%s100] sm:$0xff] %vm99, %v98
    %s102 = scalar_lea.vmem [#allocation0], 2
    %v103 = vld [vmem:[%s102] ss:$8 sm:$0xf]
    %s104 = scalar_lea.vmem [#allocation0], 2
    %v105 = vld [vmem:[%s104] ss:$8 sm:$0xf0]
    %vm106 = vcmask 1047556
    %v107 = vsel %vm106, %v105, %v103
    %108 = vrot.lane.b32.xlu0 %v107, 32
    %v109 = vpop.permute.xlu0 %108
    %vm110 = vcmask 392448
    %111 = vst.msk [vmem:[%s1] sm:$0xff] %vm110, %v109
    %s112 = scalar_lea.vmem [#allocation0], 66
    %v113 = vld [vmem:[%s112] ss:$8 sm:$0xf]
    %s114 = scalar_lea.vmem [#allocation0], 66
    %v115 = vld [vmem:[%s114] ss:$8 sm:$0xf0]
    %vm116 = vcmask 1047556
    %v117 = vsel %vm116, %v115, %v113
    %118 = vrot.lane.b32.xlu0 %v117, 32
    %v119 = vpop.permute.xlu0 %118
    %vm120 = vcmask 392448
    %s121 = scalar_lea.vmem %s1, 8
    %122 = vst.msk [vmem:[%s121] sm:$0xff] %vm120, %v119
    %s123 = scalar_lea.vmem [#allocation0], 1
    %v124 = vld [vmem:[%s123] ss:$8 sm:$0xf]
    %s125 = scalar_lea.vmem [#allocation0], 1
    %v126 = vld [vmem:[%s125] ss:$8 sm:$0xf0]
    %vm127 = vcmask 1047556
    %v128 = vsel %vm127, %v126, %v124
    %129 = vrot.lane.b32.xlu0 %v128, 16
    %v130 = vpop.permute.xlu0 %129
    %vm131 = vcmask 261248
    %132 = vst.msk [vmem:[%s1] sm:$0xff] %vm131, %v130
    %s133 = scalar_lea.vmem [#allocation0], 65
    %v134 = vld [vmem:[%s133] ss:$8 sm:$0xf]
    %s135 = scalar_lea.vmem [#allocation0], 65
    %v136 = vld [vmem:[%s135] ss:$8 sm:$0xf0]
    %vm137 = vcmask 1047556
    %v138 = vsel %vm137, %v136, %v134
    %139 = vrot.lane.b32.xlu0 %v138, 16
    %v140 = vpop.permute.xlu0 %139
    %vm141 = vcmask 261248
    %s142 = scalar_lea.vmem %s1, 8
    %143 = vst.msk [vmem:[%s142] sm:$0xff] %vm141, %v140

// kernel: forward_pallas.1
$region0: #{forward_pallas.1}
  #allocation0 [shape = 'u32[]', space=smem, size = 0x4, offset = 0x4, fixed_abs, tag = 'smem constant byte address 0x4 - core index']
  #allocation1 [shape = 'u32[72,128]{1,0:T(1,128)}', space=vmem, size = 0x9000, scoped, tag = 'internal scratch']
  %s0 = inlined_call_operand.vmem [shape: f32[32,64], index: 0, kind: input, shape index: {}]
  %s1 = inlined_call_operand.vmem [shape: f32[128,64], index: 1, kind: input, shape index: {}]
  %s2 = inlined_call_operand.vmem [shape: f32[389,32], index: 2, kind: input, shape index: {}]
  %s3 = inlined_call_operand.hbm [shape: f32[2,8,16], index: 3, kind: output, shape index: {}]
  %s4 = sld [smem:[#allocation0]]
  $region22: #{forward_pallas.1} parent=0
    _
  %s6 = ssub.s32 1, %s4
  %s7 = scalar_select 0, %s6, %s4
  $region1: #{forward_pallas.1} parent=0
    #allocation2 [shape = 'u8[8192]{0}', space=vmem, size = 0x2000, scoped, tag = 'output window, operand 0, single buffered']
    #allocation3 [shape = 's32[1]{0}', space=sflag, size = 0x4, scoped, tag = 'scoped memory for forward_pallas.1']
    %8 = vsyncpa [#allocation3], 0
    // Predicated region
    $region2: #{forward_pallas.1} parent=1 // pred_check
      _
    $region3: #{forward_pallas.1} parent=1 // pred_check_branch
      %10 = sbr.rel (0) target = $region5
    $region4: #{forward_pallas.1} parent=1 // pred_region
      _
    $region5: #{forward_pallas.1} parent=1 // pred_fallthru
      _
    // Predicated region
    $region6: #{forward_pallas.1} parent=1 // pred_check
      _
    $region7: #{forward_pallas.1} parent=1 // pred_check_branch
      %12 = sbr.rel (0) target = $region9
    $region8: #{forward_pallas.1} parent=1 // pred_region
      _
    $region9: #{forward_pallas.1} parent=1 // pred_fallthru
      _
    // Predicated region
    $region10: #{forward_pallas.1} parent=1 // pred_check
      _
    $region11: #{forward_pallas.1} parent=1 // pred_check_branch
      %14 = sbr.rel (0) target = $region13
    $region12: #{forward_pallas.1} parent=1 // pred_region
      _
    $region13: #{forward_pallas.1} parent=1 // pred_fallthru
      _
    %v15 = vld [vmem:[%s0] sm:$0xff]
    %v16 = vld [vmem:[%s0 + $0x8] sm:$0xff]
    %v17 = vld [vmem:[%s0 + $0x10] sm:$0xff]
    %v18 = vld [vmem:[%s0 + $0x18] sm:$0xff]
    %v19 = vld [vmem:[%s1 + $0x40] sm:$0xff]
    %v20 = vld [vmem:[%s1 + $0x48] sm:$0xff]
    %v21 = vld [vmem:[%s1 + $0x50] sm:$0xff]
    %v22 = vld [vmem:[%s1 + $0x58] sm:$0xff]
    %v23 = vld [vmem:[%s1 + $0x60] sm:$0xff]
    %v24 = vld [vmem:[%s1 + $0x68] sm:$0xff]
    %v25 = vld [vmem:[%s1 + $0x70] sm:$0xff]
    %v26 = vld [vmem:[%s1 + $0x78] sm:$0xff]
    %v27 = vld [vmem:[%s2 + $0x120] sm:$0xff]
    %v28 = vld [vmem:[%s2 + $0x128] sm:$0xff]
    %v29 = vld [vmem:[%s2 + $0x130] sm:$0xff]
    %v30 = vld [vmem:[%s2 + $0x138] sm:$0xff]
    %v31 = vld [vmem:[%s2 + $0x140] sm:$0xff]
    %v32 = vld [vmem:[%s2 + $0x148] sm:$0xff]
    %v33 = vld [vmem:[%s2 + $0x150] sm:$0xff]
    %v34 = vld [vmem:[%s2 + $0x158] sm:$0xff]
    %v35 = vld [vmem:[%s2 + $0x160] sm:$0xff]
    %v36 = vld [vmem:[%s2 + $0x168] sm:$0xff]
    %v37 = vld [vmem:[%s2 + $0x170] sm:$0xff]
    %v38 = vld [vmem:[%s2 + $0x178] sm:$0xff]
    %v39 = vld [vmem:[%s2 + $0x184] sm:$0x1]
    %vm40 = vcmask 523264
    %v42 = vsel %vm40, %v17, 0
    %v45 = vsel %vm40, %v18, 0
    %47 = vmatpush.msra.mxu0 0.0
    %48 = vmatpush.msra.mxu0 0.0
    %49 = vmatpush.msra.mxu0 0.0
    %50 = vmatpush.msra.mxu0 0.0
    %51 = vmatpush.msra.mxu0 0.0
    %52 = vmatpush.msra.mxu0 0.0
    %53 = vmatpush.msra.mxu0 0.0
    %54 = vmatpush.msra.mxu0 0.0
    %55 = vmatpush.msra.mxu0 %v34
    %56 = vmatpush.msra.mxu0 %v33
    %57 = vmatpush.msra.mxu0 %v32
    %58 = vmatpush.msra.mxu0 %v31
    %59 = vmatpush.msra.mxu0 %v30
    %60 = vmatpush.msra.mxu0 %v29
    %61 = vmatpush.msra.mxu0 %v28
    %62 = vmatpush.msra.mxu0 %v27
    %63 = vmatmul.f32.gmra.mxu0 %v42
    %v64 = vpop.f32.mrf.mxu0
    %v65 = vadd.f32 0.0, %v64
    %66 = vmatmul.f32.gmra.mxu0 %v45
    %v67 = vpop.f32.mrf.mxu0
    %v68 = vadd.f32 0.0, %v67
    %69 = vdwg.mxu0
    %v70 = vld [vmem:[%s1] sm:$0xff]
    %v71 = vld [vmem:[%s1 + $0x8] sm:$0xff]
    %v72 = vld [vmem:[%s1 + $0x10] sm:$0xff]
    %v73 = vld [vmem:[%s1 + $0x18] sm:$0xff]
    %v74 = vld [vmem:[%s2] sm:$0xff]
    %v75 = vld [vmem:[%s2 + $0x8] sm:$0xff]
    %v76 = vld [vmem:[%s2 + $0x10] sm:$0xff]
    %v77 = vld [vmem:[%s2 + $0x18] sm:$0xff]
    %v78 = vld [vmem:[%s2 + $0x20] sm:$0xff]
    %v79 = vld [vmem:[%s2 + $0x28] sm:$0xff]
    %v80 = vld [vmem:[%s2 + $0x30] sm:$0xff]
    %v81 = vld [vmem:[%s2 + $0x38] sm:$0xff]
    %v82 = vld [vmem:[%s2 + $0x80] sm:$0xff]
    %v83 = vld [vmem:[%s2 + $0x88] sm:$0xff]
    %v84 = vld [vmem:[%s2 + $0x90] sm:$0xff]
    %v85 = vld [vmem:[%s2 + $0x98] sm:$0xff]
    %v86 = vld [vmem:[%s2 + $0xc0] sm:$0xff]
    %v87 = vld [vmem:[%s2 + $0xc8] sm:$0xff]
    %v88 = vld [vmem:[%s2 + $0xd0] sm:$0xff]
    %v89 = vld [vmem:[%s2 + $0xd8] sm:$0xff]
    %v90 = vld [vmem:[%s2 + $0x100] sm:$0xff]
    %v91 = vld [vmem:[%s2 + $0x108] sm:$0xff]
    %v92 = vld [vmem:[%s2 + $0x180] sm:$0x1]
    %v93 = vld [vmem:[%s2 + $0x182] sm:$0x1]
    %vm94 = vcmask 261120
    %v96 = vsel %vm94, %v65, 0
    %98 = vmatpush.msra.mxu0 0.0
    %99 = vmatpush.msra.mxu0 0.0
    %100 = vmatpush.msra.mxu0 0.0
    %101 = vmatpush.msra.mxu0 0.0
    %102 = vmatpush.msra.mxu0 0.0
    %103 = vmatpush.msra.mxu0 0.0
    %104 = vmatpush.msra.mxu0 0.0
    %105 = vmatpush.msra.mxu0 0.0
    %106 = vmatpush.msra.mxu0 0.0
    %107 = vmatpush.msra.mxu0 0.0
    %108 = vmatpush.msra.mxu0 0.0
    %109 = vmatpush.msra.mxu0 0.0
    %110 = vmatpush.msra.mxu0 %v73
    %111 = vmatpush.msra.mxu0 %v72
    %112 = vmatpush.msra.mxu0 %v71
    %113 = vmatpush.msra.mxu0 %v70
    %114 = vmatmul.f32.gmra.mxu0 %v96
    %v115 = vpop.f32.mrf.mxu0
    %v116 = vadd.f32 0.0, %v115
    %117 = vdwg.mxu0
    %v118 = vmul.f32 %v116, 0.35355338
    %v119 = vadd.f32 %v118, %v15
    %v120 = vsel %vm40, %v119, -inf
    %121 = vmax.xlane.f32.xlu0 %v120
    %v122 = vpop.xlane.xlu0 %121
    %v123 = vsub.f32 %v119, %v122
    %v124 = vmul.f32 %v123, 1.442695
    %v125 = vpow.pop %v124
    %v127 = vsel %vm40, %v125, 0
    %129 = vmatpush.msra.mxu0 0.0
    %130 = vmatpush.msra.mxu0 0.0
    %131 = vmatpush.msra.mxu0 0.0
    %132 = vmatpush.msra.mxu0 0.0
    %133 = vmatpush.msra.mxu0 0.0
    %134 = vmatpush.msra.mxu0 0.0
    %135 = vmatpush.msra.mxu0 0.0
    %136 = vmatpush.msra.mxu0 0.0
    %137 = vmatpush.msra.mxu0 %v26
    %138 = vmatpush.msra.mxu0 %v25
    %139 = vmatpush.msra.mxu0 %v24
    %140 = vmatpush.msra.mxu0 %v23
    %141 = vmatpush.msra.mxu0 %v22
    %142 = vmatpush.msra.mxu0 %v21
    %143 = vmatpush.msra.mxu0 %v20
    %144 = vmatpush.msra.mxu0 %v19
    %145 = vmatmul.f32.gmra.mxu0 %v127
    %v146 = vpop.f32.mrf.mxu0
    %v147 = vadd.f32 0.0, %v146
    %148 = vdwg.mxu0
    %v149 = vrcp.pop %v147
    %v150 = vmul.f32 %v147, %v149
    %v151 = vsub.f32 1.0, %v150
    %v152 = vmul.f32 %v149, %v151
    %v153 = vadd.f32 %v149, %v152
    %vm154 = vweird.f32 %v147
    %vm155 = vweird.f32 %v149
    %vm156 = vmor %vm154, %vm155
    %v157 = vsel %vm156, %v149, %v153
    %v158 = vand.u32 2147483647, %v147
    %vm159 = vcmp.eq.f32.partialorder %v158, 8.507059e+37
    %v160 = vand.u32 %v147, 2147483648
    %v161 = vor.u32 1.1754944e-38, %v160
    %v162 = vsel %vm159, %v161, %v157
    %v163 = vmul.f32 %v125, %v162
    %v165 = vsel %vm40, %v163, 0
    %167 = vmatpush.msra.mxu0 0.0
    %168 = vmatpush.msra.mxu0 0.0
    %169 = vmatpush.msra.mxu0 0.0
    %170 = vmatpush.msra.mxu0 0.0
    %171 = vmatpush.msra.mxu0 0.0
    %172 = vmatpush.msra.mxu0 0.0
    %173 = vmatpush.msra.mxu0 0.0
    %174 = vmatpush.msra.mxu0 0.0
    %175 = vmatpush.msra.mxu0 %v81
    %176 = vmatpush.msra.mxu0 %v80
    %177 = vmatpush.msra.mxu0 %v79
    %178 = vmatpush.msra.mxu0 %v78
    %179 = vmatpush.msra.mxu0 %v77
    %180 = vmatpush.msra.mxu0 %v76
    %181 = vmatpush.msra.mxu0 %v75
    %182 = vmatpush.msra.mxu0 %v74
    %183 = vmatmul.f32.gmra.mxu0 %v165
    %v184 = vpop.f32.mrf.mxu0
    %v185 = vadd.f32 0.0, %v184
    %186 = vdwg.mxu0
    %v187 = vperm.slane %v92, 0
    %v189 = vsel %vm94, %v185, 0
    %191 = vmatpush.msra.mxu0 0.0
    %192 = vmatpush.msra.mxu0 0.0
    %193 = vmatpush.msra.mxu0 0.0
    %194 = vmatpush.msra.mxu0 0.0
    %195 = vmatpush.msra.mxu0 0.0
    %196 = vmatpush.msra.mxu0 0.0
    %197 = vmatpush.msra.mxu0 0.0
    %198 = vmatpush.msra.mxu0 0.0
    %199 = vmatpush.msra.mxu0 0.0
    %200 = vmatpush.msra.mxu0 0.0
    %201 = vmatpush.msra.mxu0 0.0
    %202 = vmatpush.msra.mxu0 0.0
    %203 = vmatpush.msra.mxu0 %v85
    %204 = vmatpush.msra.mxu0 %v84
    %205 = vmatpush.msra.mxu0 %v83
    %206 = vmatpush.msra.mxu0 %v82
    %207 = vmatmul.f32.gmra.mxu0 %v189
    %v208 = vpop.f32.mrf.mxu0
    %v209 = vadd.f32 %v187, %v208
    %210 = vdwg.mxu0
    %v211 = vmax.f32 %v209, 0.0
    %v212 = vperm.slane %v93, 0
    %v214 = vsel %vm94, %v211, 0
    %216 = vmatpush.msra.mxu0 0.0
    %217 = vmatpush.msra.mxu0 0.0
    %218 = vmatpush.msra.mxu0 0.0
    %219 = vmatpush.msra.mxu0 0.0
    %220 = vmatpush.msra.mxu0 0.0
    %221 = vmatpush.msra.mxu0 0.0
    %222 = vmatpush.msra.mxu0 0.0
    %223 = vmatpush.msra.mxu0 0.0
    %224 = vmatpush.msra.mxu0 0.0
    %225 = vmatpush.msra.mxu0 0.0
    %226 = vmatpush.msra.mxu0 0.0
    %227 = vmatpush.msra.mxu0 0.0
    %228 = vmatpush.msra.mxu0 %v89
    %229 = vmatpush.msra.mxu0 %v88
    %230 = vmatpush.msra.mxu0 %v87
    %231 = vmatpush.msra.mxu0 %v86
    %232 = vmatmul.f32.gmra.mxu0 %v214
    %v233 = vpop.f32.mrf.mxu0
    %v234 = vadd.f32 %v212, %v233
    %235 = vdwg.mxu0
    %v236 = vadd.f32 %v234, %v185
    %v237 = vperm.slane %v39, 0
    %v239 = vsel %vm94, %v236, 0
    %241 = vmatpush.msra.mxu0 0.0
    %242 = vmatpush.msra.mxu0 0.0
    %243 = vmatpush.msra.mxu0 0.0
    %244 = vmatpush.msra.mxu0 0.0
    %245 = vmatpush.msra.mxu0 0.0
    %246 = vmatpush.msra.mxu0 0.0
    %247 = vmatpush.msra.mxu0 0.0
    %248 = vmatpush.msra.mxu0 0.0
    %249 = vmatpush.msra.mxu0 0.0
    %250 = vmatpush.msra.mxu0 0.0
    %251 = vmatpush.msra.mxu0 0.0
    %252 = vmatpush.msra.mxu0 0.0
    %253 = vmatpush.msra.mxu0 %v38
    %254 = vmatpush.msra.mxu0 %v37
    %255 = vmatpush.msra.mxu0 %v36
    %256 = vmatpush.msra.mxu0 %v35
    %257 = vmatmul.f32.gmra.mxu0 %v239
    %v258 = vpop.f32.mrf.mxu0
    %v259 = vadd.f32 %v237, %v258
    %260 = vdwg.mxu0
    %v262 = vsel %vm94, %v259, 0
    %v265 = vsel %vm94, %v90, 0
    %v268 = vsel %vm94, %v91, 0
    %270 = vmatpush.xpose.msra.mxu0 0.0
    %271 = vmatpush.xpose.msra.mxu0 0.0
    %272 = vmatpush.xpose.msra.mxu0 0.0
    %273 = vmatpush.xpose.msra.mxu0 0.0
    %274 = vmatpush.xpose.msra.mxu0 0.0
    %275 = vmatpush.xpose.msra.mxu0 0.0
    %276 = vmatpush.xpose.msra.mxu0 0.0
    %277 = vmatpush.xpose.msra.mxu0 0.0
    %278 = vmatpush.xpose.msra.mxu0 0.0
    %279 = vmatpush.xpose.msra.mxu0 0.0
    %280 = vmatpush.xpose.msra.mxu0 0.0
    %281 = vmatpush.xpose.msra.mxu0 0.0
    %282 = vmatpush.xpose.msra.mxu0 0.0
    %283 = vmatpush.xpose.msra.mxu0 0.0
    %284 = vmatpush.xpose.msra.mxu0 %v268
    %285 = vmatpush.xpose.msra.mxu0 %v265
    %286 = vmatmul.f32.gmra.mxu0 %v262
    %v287 = vpop.f32.mrf.mxu0
    %v288 = vadd.f32 0.0, %v287
    %289 = vdwg.mxu0
    %v290 = vmul.f32 %v288, 0.17677669
    %v291 = vtanh.pop %v290
    %v292 = vmul.f32 %v291, 10.0
    %v293 = vadd.f32 %v292, %v15
    %vm294 = vcmask 130048
    %v295 = vsel %vm294, %v293, -inf
    %296 = vmax.xlane.f32.xlu0 %v295
    %v297 = vpop.xlane.xlu0 %296
    %v298 = vsub.f32 %v293, %v297
    %v299 = vmul.f32 %v298, 1.442695
    %v300 = vpow.pop %v299
    %v301 = vsel %vm294, %v300, 0.0
    %302 = vadd.xlane.f32.xlu0 %v301
    %v303 = vpop.xlane.xlu0 %302
    %v304 = vrcp.pop %v303
    %v305 = vmul.f32 %v303, %v304
    %v306 = vsub.f32 1.0, %v305
    %v307 = vmul.f32 %v304, %v306
    %v308 = vadd.f32 %v304, %v307
    %vm309 = vweird.f32 %v303
    %vm310 = vweird.f32 %v304
    %vm311 = vmor %vm309, %vm310
    %v312 = vsel %vm311, %v304, %v308
    %v313 = vand.u32 2147483647, %v303
    %vm314 = vcmp.eq.f32.partialorder %v313, 8.507059e+37
    %v315 = vand.u32 %v303, 2147483648
    %v316 = vor.u32 1.1754944e-38, %v315
    %v317 = vsel %vm314, %v316, %v312
    %v318 = vmul.f32 %v300, %v317
    %319 = vst.msk [vmem:[#allocation2] sm:$0xff] %vm294, %v318
    %v320 = vld [vmem:[%s1 + $0x20] sm:$0xff]
    %v321 = vld [vmem:[%s1 + $0x28] sm:$0xff]
    %v322 = vld [vmem:[%s1 + $0x30] sm:$0xff]
    %v323 = vld [vmem:[%s1 + $0x38] sm:$0xff]
    %v324 = vld [vmem:[%s2 + $0x40] sm:$0xff]
    %v325 = vld [vmem:[%s2 + $0x48] sm:$0xff]
    %v326 = vld [vmem:[%s2 + $0x50] sm:$0xff]
    %v327 = vld [vmem:[%s2 + $0x58] sm:$0xff]
    %v328 = vld [vmem:[%s2 + $0x60] sm:$0xff]
    %v329 = vld [vmem:[%s2 + $0x68] sm:$0xff]
    %v330 = vld [vmem:[%s2 + $0x70] sm:$0xff]
    %v331 = vld [vmem:[%s2 + $0x78] sm:$0xff]
    %v332 = vld [vmem:[%s2 + $0xa0] sm:$0xff]
    %v333 = vld [vmem:[%s2 + $0xa8] sm:$0xff]
    %v334 = vld [vmem:[%s2 + $0xb0] sm:$0xff]
    %v335 = vld [vmem:[%s2 + $0xb8] sm:$0xff]
    %v336 = vld [vmem:[%s2 + $0xe0] sm:$0xff]
    %v337 = vld [vmem:[%s2 + $0xe8] sm:$0xff]
    %v338 = vld [vmem:[%s2 + $0xf0] sm:$0xff]
    %v339 = vld [vmem:[%s2 + $0xf8] sm:$0xff]
    %v340 = vld [vmem:[%s2 + $0x110] sm:$0xff]
    %v341 = vld [vmem:[%s2 + $0x118] sm:$0xff]
    %v342 = vld [vmem:[%s2 + $0x181] sm:$0x1]
    %v343 = vld [vmem:[%s2 + $0x183] sm:$0x1]
    %v345 = vsel %vm94, %v68, 0
    %347 = vmatpush.msra.mxu0 0.0
    %348 = vmatpush.msra.mxu0 0.0
    %349 = vmatpush.msra.mxu0 0.0
    %350 = vmatpush.msra.mxu0 0.0
    %351 = vmatpush.msra.mxu0 0.0
    %352 = vmatpush.msra.mxu0 0.0
    %353 = vmatpush.msra.mxu0 0.0
    %354 = vmatpush.msra.mxu0 0.0
    %355 = vmatpush.msra.mxu0 0.0
    %356 = vmatpush.msra.mxu0 0.0
    %357 = vmatpush.msra.mxu0 0.0
    %358 = vmatpush.msra.mxu0 0.0
    %359 = vmatpush.msra.mxu0 %v323
    %360 = vmatpush.msra.mxu0 %v322
    %361 = vmatpush.msra.mxu0 %v321
    %362 = vmatpush.msra.mxu0 %v320
    %363 = vmatmul.f32.gmra.mxu0 %v345
    %v364 = vpop.f32.mrf.mxu0
    %v365 = vadd.f32 0.0, %v364
    %366 = vdwg.mxu0
    %v367 = vmul.f32 %v365, 0.35355338
    %v368 = vadd.f32 %v367, %v16
    %v369 = vsel %vm40, %v368, -inf
    %370 = vmax.xlane.f32.xlu0 %v369
    %v371 = vpop.xlane.xlu0 %370
    %v372 = vsub.f32 %v368, %v371
    %v373 = vmul.f32 %v372, 1.442695
    %v374 = vpow.pop %v373
    %v376 = vsel %vm40, %v374, 0
    %378 = vmatpush.msra.mxu0 0.0
    %379 = vmatpush.msra.mxu0 0.0
    %380 = vmatpush.msra.mxu0 0.0
    %381 = vmatpush.msra.mxu0 0.0
    %382 = vmatpush.msra.mxu0 0.0
    %383 = vmatpush.msra.mxu0 0.0
    %384 = vmatpush.msra.mxu0 0.0
    %385 = vmatpush.msra.mxu0 0.0
    %386 = vmatpush.msra.mxu0 %v26
    %387 = vmatpush.msra.mxu0 %v25
    %388 = vmatpush.msra.mxu0 %v24
    %389 = vmatpush.msra.mxu0 %v23
    %390 = vmatpush.msra.mxu0 %v22
    %391 = vmatpush.msra.mxu0 %v21
    %392 = vmatpush.msra.mxu0 %v20
    %393 = vmatpush.msra.mxu0 %v19
    %394 = vmatmul.f32.gmra.mxu0 %v376
    %v395 = vpop.f32.mrf.mxu0
    %v396 = vadd.f32 0.0, %v395
    %397 = vdwg.mxu0
    %v398 = vrcp.pop %v396
    %v399 = vmul.f32 %v396, %v398
    %v400 = vsub.f32 1.0, %v399
    %v401 = vmul.f32 %v398, %v400
    %v402 = vadd.f32 %v398, %v401
    %vm403 = vweird.f32 %v396
    %vm404 = vweird.f32 %v398
    %vm405 = vmor %vm403, %vm404
    %v406 = vsel %vm405, %v398, %v402
    %v407 = vand.u32 2147483647, %v396
    %vm408 = vcmp.eq.f32.partialorder %v407, 8.507059e+37
    %v409 = vand.u32 %v396, 2147483648
    %v410 = vor.u32 1.1754944e-38, %v409
    %v411 = vsel %vm408, %v410, %v406
    %v412 = vmul.f32 %v374, %v411
    %v414 = vsel %vm40, %v412, 0
    %416 = vmatpush.msra.mxu0 0.0
    %417 = vmatpush.msra.mxu0 0.0
    %418 = vmatpush.msra.mxu0 0.0
    %419 = vmatpush.msra.mxu0 0.0
    %420 = vmatpush.msra.mxu0 0.0
    %421 = vmatpush.msra.mxu0 0.0
    %422 = vmatpush.msra.mxu0 0.0
    %423 = vmatpush.msra.mxu0 0.0
    %424 = vmatpush.msra.mxu0 %v331
    %425 = vmatpush.msra.mxu0 %v330
    %426 = vmatpush.msra.mxu0 %v329
    %427 = vmatpush.msra.mxu0 %v328
    %428 = vmatpush.msra.mxu0 %v327
    %429 = vmatpush.msra.mxu0 %v326
    %430 = vmatpush.msra.mxu0 %v325
    %431 = vmatpush.msra.mxu0 %v324
    %432 = vmatmul.f32.gmra.mxu0 %v414
    %v433 = vpop.f32.mrf.mxu0
    %v434 = vadd.f32 0.0, %v433
    %435 = vdwg.mxu0
    %v436 = vperm.slane %v342, 0
    %v438 = vsel %vm94, %v434, 0
    %440 = vmatpush.msra.mxu0 0.0
    %441 = vmatpush.msra.mxu0 0.0
    %442 = vmatpush.msra.mxu0 0.0
    %443 = vmatpush.msra.mxu0 0.0
    %444 = vmatpush.msra.mxu0 0.0
    %445 = vmatpush.msra.mxu0 0.0
    %446 = vmatpush.msra.mxu0 0.0
    %447 = vmatpush.msra.mxu0 0.0
    %448 = vmatpush.msra.mxu0 0.0
    %449 = vmatpush.msra.mxu0 0.0
    %450 = vmatpush.msra.mxu0 0.0
    %451 = vmatpush.msra.mxu0 0.0
    %452 = vmatpush.msra.mxu0 %v335
    %453 = vmatpush.msra.mxu0 %v334
    %454 = vmatpush.msra.mxu0 %v333
    %455 = vmatpush.msra.mxu0 %v332
    %456 = vmatmul.f32.gmra.mxu0 %v438
    %v457 = vpop.f32.mrf.mxu0
    %v458 = vadd.f32 %v436, %v457
    %459 = vdwg.mxu0
    %v460 = vmax.f32 %v458, 0.0
    %v461 = vperm.slane %v343, 0
    %v463 = vsel %vm94, %v460, 0
    %465 = vmatpush.msra.mxu0 0.0
    %466 = vmatpush.msra.mxu0 0.0
    %467 = vmatpush.msra.mxu0 0.0
    %468 = vmatpush.msra.mxu0 0.0
    %469 = vmatpush.msra.mxu0 0.0
    %470 = vmatpush.msra.mxu0 0.0
    %471 = vmatpush.msra.mxu0 0.0
    %472 = vmatpush.msra.mxu0 0.0
    %473 = vmatpush.msra.mxu0 0.0
    %474 = vmatpush.msra.mxu0 0.0
    %475 = vmatpush.msra.mxu0 0.0
    %476 = vmatpush.msra.mxu0 0.0
    %477 = vmatpush.msra.mxu0 %v339
    %478 = vmatpush.msra.mxu0 %v338
    %479 = vmatpush.msra.mxu0 %v337
    %480 = vmatpush.msra.mxu0 %v336
    %481 = vmatmul.f32.gmra.mxu0 %v463
    %v482 = vpop.f32.mrf.mxu0
    %v483 = vadd.f32 %v461, %v482
    %484 = vdwg.mxu0
    %v485 = vadd.f32 %v483, %v434
    %v487 = vsel %vm94, %v485, 0
    %489 = vmatpush.msra.mxu0 0.0
    %490 = vmatpush.msra.mxu0 0.0
    %491 = vmatpush.msra.mxu0 0.0
    %492 = vmatpush.msra.mxu0 0.0
    %493 = vmatpush.msra.mxu0 0.0
    %494 = vmatpush.msra.mxu0 0.0
    %495 = vmatpush.msra.mxu0 0.0
    %496 = vmatpush.msra.mxu0 0.0
    %497 = vmatpush.msra.mxu0 0.0
    %498 = vmatpush.msra.mxu0 0.0
    %499 = vmatpush.msra.mxu0 0.0
    %500 = vmatpush.msra.mxu0 0.0
    %501 = vmatpush.msra.mxu0 %v38
    %502 = vmatpush.msra.mxu0 %v37
    %503 = vmatpush.msra.mxu0 %v36
    %504 = vmatpush.msra.mxu0 %v35
    %505 = vmatmul.f32.gmra.mxu0 %v487
    %v506 = vpop.f32.mrf.mxu0
    %v507 = vadd.f32 %v237, %v506
    %508 = vdwg.mxu0
    %v510 = vsel %vm94, %v507, 0
    %v513 = vsel %vm94, %v340, 0
    %v516 = vsel %vm94, %v341, 0
    %518 = vmatpush.xpose.msra.mxu0 0.0
    %519 = vmatpush.xpose.msra.mxu0 0.0
    %520 = vmatpush.xpose.msra.mxu0 0.0
    %521 = vmatpush.xpose.msra.mxu0 0.0
    %522 = vmatpush.xpose.msra.mxu0 0.0
    %523 = vmatpush.xpose.msra.mxu0 0.0
    %524 = vmatpush.xpose.msra.mxu0 0.0
    %525 = vmatpush.xpose.msra.mxu0 0.0
    %526 = vmatpush.xpose.msra.mxu0 0.0
    %527 = vmatpush.xpose.msra.mxu0 0.0
    %528 = vmatpush.xpose.msra.mxu0 0.0
    %529 = vmatpush.xpose.msra.mxu0 0.0
    %530 = vmatpush.xpose.msra.mxu0 0.0
    %531 = vmatpush.xpose.msra.mxu0 0.0
    %532 = vmatpush.xpose.msra.mxu0 %v516
    %533 = vmatpush.xpose.msra.mxu0 %v513
    %534 = vmatmul.f32.gmra.mxu0 %v510
    %v535 = vpop.f32.mrf.mxu0
    %v536 = vadd.f32 0.0, %v535
    %537 = vdwg.mxu0
    %v538 = vmul.f32 %v536, 0.17677669
    %v539 = vtanh.pop %v538
    %v540 = vmul.f32 %v539, 10.0
    %v541 = vadd.f32 %v540, %v16
    %v542 = vsel %vm294, %v541, -inf
    %543 = vmax.xlane.f32.xlu0 %v542
    %v544 = vpop.xlane.xlu0 %543
    %v545 = vsub.f32 %v541, %v544
    %v546 = vmul.f32 %v545, 1.442695
    %v547 = vpow.pop %v546
    %v548 = vsel %vm294, %v547, 0.0
    %549 = vadd.xlane.f32.xlu0 %v548
    %v550 = vpop.xlane.xlu0 %549
    %v551 = vrcp.pop %v550
    %v552 = vmul.f32 %v550, %v551
    %v553 = vsub.f32 1.0, %v552
    %v554 = vmul.f32 %v551, %v553
    %v555 = vadd.f32 %v551, %v554
    %vm556 = vweird.f32 %v550
    %vm557 = vweird.f32 %v551
    %vm558 = vmor %vm556, %vm557
    %v559 = vsel %vm558, %v551, %v555
    %v560 = vand.u32 2147483647, %v550
    %vm561 = vcmp.eq.f32.partialorder %v560, 8.507059e+37
    %v562 = vand.u32 %v550, 2147483648
    %v563 = vor.u32 1.1754944e-38, %v562
    %v564 = vsel %vm561, %v563, %v559
    %v565 = vmul.f32 %v547, %v564
    %s566 = scalar_lea.vmem [#allocation2], 8
    %567 = vst.msk [vmem:[%s566] sm:$0xff] %vm294, %v565
    // Predicated region
    $region14: #{forward_pallas.1} parent=1 // pred_check
      _
    $region15: #{forward_pallas.1} parent=1 // pred_check_branch
      %569 = sbr.rel (0) target = $region17
    $region16: #{forward_pallas.1} parent=1 // pred_region
      %571 = vsyncadd [#allocation3], 0
      %s572 = sshll.u32 [#allocation2], 4
      %s573 = int_to_ptr.vmem [resolvable:$true] %s572
      %s574 = sshll.u32 %s3, 4
      %s575 = int_to_ptr.hbm [resolvable:$true] %s574
      %580 = dma.vmem_to_hbm [thread:$0]  %s573, 256, %s575, [#allocation3], 128, 128, 8
    $region17: #{forward_pallas.1} parent=1 // pred_fallthru
      _
    // Predicated region
    $region18: #{forward_pallas.1} parent=1 // pred_check
      _
    $region19: #{forward_pallas.1} parent=1 // pred_check_branch
      %582 = sbr.rel (0) target = $region21
    $region20: #{forward_pallas.1} parent=1 // pred_region
      %584 = dma.done [#allocation3], 256
    $region21: #{forward_pallas.1} parent=1 // pred_fallthru
      _
    %585 = vsyncpa [#allocation3], 1

</llo_original>
